<compile_context>
chip_gen: v7x
topology: tpu7x:2x2x1
jax: 0.10.0
libtpu: 0.0.40
codegen_flags: <defaults>
</compile_context>

<pallas_src>
import functools

import jax
import jax.numpy as jnp
from jax.experimental import pallas as pl
from jax.experimental.pallas import tpu as pltpu


def _round_up(x, m):
    return (x + m - 1) // m * m


# ----------------------------- Pallas kernel --------------------------------

def _conv_seqnorm_relu_kernel(x_ref, m_ref, rs_ref, w_ref, g_ref, b_ref, o_ref,
                              patch_ref, *, k, cin_pad, l_out_pad, stride,
                              dilation, eps):
    # x_ref    : (B_tile, Cin_pad, L_block)      zero-padded input block
    # m_ref    : (B_tile, 1, L_out_pad)          sequence mask (zero tail past L_out)
    # rs_ref   : (B_tile, 1, 1)                  precomputed 1/(mask_count * Cout)
    # w_ref    : (Cout_pad, K*Cin_pad)           folded conv weight
    # g_ref    : (Cout_pad, 1)  b_ref: (Cout_pad, 1)  SeqNorm affine params
    # o_ref    : (B_tile, Cout_pad, L_out_pad)   output tile (lane-dense stores)
    # patch_ref: (K*Cin_pad, B_tile*L_out_pad)   VMEM im2col scratch
    b_tile = x_ref.shape[0]

    # ---- in-kernel im2col: K lane-shifted tap reads per sample, written to the
    #      VMEM scratch.  All scratch writes are (sublane, 128)-aligned; only the
    #      tap reads are lane-shifted.  No K x HBM inflation. ----
    for s in range(b_tile):
        for t in range(k):
            start = t * dilation
            if stride == 1:
                tap = x_ref[s, :, pl.ds(start, l_out_pad)]
            else:
                tap = x_ref[s, :, pl.ds(start, l_out_pad, stride)]
            patch_ref[t * cin_pad:(t + 1) * cin_pad,
                      s * l_out_pad:(s + 1) * l_out_pad] = tap

    # ---- ONE wide MXU matmul per grid step (batch folded onto the lane axis):
    #      (Cout_pad, K*Cin_pad) @ (K*Cin_pad, B_tile*L_out_pad) -> f32 acc ----
    acc = jnp.dot(w_ref[...], patch_ref[...], preferred_element_type=jnp.float32)

    gamma = g_ref[...]    # (Cout_pad, 1)  loaded once per grid step
    beta = b_ref[...]     # (Cout_pad, 1)

    # ---- SeqNorm + affine + ReLU + mask, per sample on aligned 128-lane slices
    #      of the shared f32 accumulator (VPU/XLU tail only, no more matmuls) ----
    for s in range(b_tile):
        m = m_ref[s]                                        # (1, L_out_pad)
        rs = rs_ref[s]                                      # (1, 1)
        y = acc[:, s * l_out_pad:(s + 1) * l_out_pad] * m   # masked activations
        mean = jnp.sum(y) * rs
        var = jnp.sum(y * y) * rs - mean * mean             # exact: masked y entries are 0
        var = jnp.maximum(var, 0.0)                         # guard one-pass cancellation
        z = (y - mean) * jax.lax.rsqrt(var + eps)
        z = z * gamma + beta                                # per-channel affine
        o_ref[s] = (jnp.maximum(z, 0.0) * m).astype(o_ref.dtype)


# ------------------------------ Tiling plan -----------------------------------

def _plan_tiles(n, cin_pad, kc_pad, cout_pad, l_block, l_out_pad, in_itemsize,
                requested_tile=None):
    """Pick B_tile / grid length / vmem_limit: amortize per-step overhead, account
    for double buffering + resident blocks + scratch, stay within a generation-aware
    VMEM budget, and keep an even grid length for v7x's 2 TensorCores."""
    try:
        vmem_cap = int(pltpu.get_tpu_info().vmem_capacity_bytes)
    except Exception:
        vmem_cap = 64 << 20                     # conservative fallback (v7x per-TC VMEM)
    budget = vmem_cap // 4                      # live-block budget: 16 MiB v7x, 32 MiB v5e/v6e

    def live_bytes(bt):
        lanes = bt * l_out_pad
        x_blk = 2 * bt * cin_pad * l_block * in_itemsize     # double-buffered input
        m_blk = 2 * bt * l_out_pad * 4                       # mask
        r_blk = 2 * bt * 4                                   # per-sample rsum
        o_blk = 2 * bt * cout_pad * l_out_pad * 4            # double-buffered output
        w_blk = 2 * cout_pad * (kc_pad + 2) * in_itemsize    # weight (+ affine params)
        scratch = kc_pad * lanes * in_itemsize               # im2col scratch
        temps = 3 * cout_pad * lanes * 4                     # acc + elementwise temporaries
        return x_blk + m_blk + r_blk + o_blk + w_blk + scratch + temps

    if requested_tile is not None:
        bt = max(1, min(int(requested_tile), n))
        num_tiles = -(-n // bt)
    else:
        bt = 1
        for cand in range(2, 9):                # biggest tile that fits the budget
            if live_bytes(cand) <= budget:
                bt = cand
        if n > 1:
            bt = min(bt, (n + 1) // 2)          # keep >= 2 grid steps for megacore
        bt = max(1, min(bt, n))
        num_tiles = -(-n // bt)
        if n > 1 and num_tiles % 2 == 1:
            # v7x shares the "parallel" grid axis across 2 TensorCores: keep the
            # grid length even so neither core idles on the last step.
            bt_alt = -(-n // (num_tiles + 1))
            if (-(-n // bt_alt)) % 2 == 0:
                bt = bt_alt
                num_tiles = -(-n // bt)
            else:
                num_tiles += 1                  # pad one extra (fully masked) tile

    vmem_limit = int(min(vmem_cap * 3 // 4, max(live_bytes(bt) * 2, 16 << 20)))
    return bt, num_tiles, vmem_limit


# ------------------------------ Wrapper --------------------------------------

def conv_module_forward(x_nchw, mask_nchw, weight, gamma, beta,
                        *, stride=1, padding=0, dilation=1, eps=1e-6,
                        batch_tile=None, compute_dtype=jnp.float32):
    """Forward pass of the Conv module.

    x_nchw    : (N, Cin, L, 1) float32
    mask_nchw : (N, 1, L_out, 1) float32 (0/1)
    weight    : (Cout, Cin, K, 1) conv weight (PyTorch OIHW layout)
    gamma, beta : (Cout,) SeqNorm affine params
    compute_dtype : dtype of the matmul inputs (f32 or bf16); accumulation is f32.
    Returns (N, Cout, L_out, 1) float32.
    """
    N, Cin, L, Wdim = x_nchw.shape
    assert Wdim == 1, "this module operates on (N, C, L, 1) sequence tensors"
    Cout, Cin_w, K, Kw = weight.shape
    assert Cin_w == Cin and Kw == 1
    L_out = (L + 2 * padding - dilation * (K - 1) - 1) // stride + 1
    assert mask_nchw.shape == (N, 1, L_out, 1), "mask must have output-length L"

    sub = 16 if compute_dtype == jnp.bfloat16 else 8      # sublane tile for the matmul dtype
    Cin_pad = _round_up(Cin, sub)
    Cout_pad = _round_up(max(Cout, sub), sub)
    KC_pad = K * Cin_pad
    L_out_pad = _round_up(L_out, 128)                     # lane-dense, unmasked stores
    span_pad = (L_out_pad - 1) * stride + 1
    L_block = _round_up((K - 1) * dilation + span_pad, 128)

    # ---- Layout plumbing (wrapper): zero padding only, NO im2col ----
    x = x_nchw[..., 0].astype(compute_dtype)              # (N, Cin, L)
    x = jnp.pad(x, ((0, 0), (0, Cin_pad - Cin), (padding, L_block - L - padding)))

    mask = mask_nchw[..., 0].astype(jnp.float32)          # (N, 1, L_out)
    mask = jnp.pad(mask, ((0, 0), (0, 0), (0, L_out_pad - L_out)))   # zero tail: exact stats

    # Folded weight: w2t[o, t*Cin_pad + c] = weight[o, c, t]; zero rows/cols are exact.
    w_otc = jnp.transpose(weight[..., 0], (0, 2, 1))      # (Cout, K, Cin)
    w_otc = jnp.pad(w_otc, ((0, Cout_pad - Cout), (0, 0), (0, Cin_pad - Cin)))
    w2t = w_otc.reshape(Cout_pad, KC_pad).astype(compute_dtype)

    g = jnp.pad(gamma.reshape(-1).astype(jnp.float32), (0, Cout_pad - Cout)).reshape(Cout_pad, 1)
    b = jnp.pad(beta.reshape(-1).astype(jnp.float32), (0, Cout_pad - Cout)).reshape(Cout_pad, 1)

    # Precomputed per-sample 1/(mask_count * Cout): the kernel skips the mask
    # reduction and the divide (real Cout — zero-padded channels contribute 0).
    counts = jnp.maximum(jnp.sum(mask, axis=(1, 2)), 1.0)           # (N,)
    rsum = (1.0 / (counts * float(Cout))).reshape(N, 1, 1).astype(jnp.float32)

    in_itemsize = 2 if compute_dtype == jnp.bfloat16 else 4
    B_tile, num_tiles, vmem_limit = _plan_tiles(
        N, Cin_pad, KC_pad, Cout_pad, L_block, L_out_pad, in_itemsize,
        requested_tile=batch_tile)
    N_pad = num_tiles * B_tile
    if N_pad != N:
        pad_n = N_pad - N
        x = jnp.pad(x, ((0, pad_n), (0, 0), (0, 0)))
        mask = jnp.pad(mask, ((0, pad_n), (0, 0), (0, 0)))           # zero mask -> zero output
        rsum = jnp.pad(rsum, ((0, pad_n), (0, 0), (0, 0)), constant_values=1.0)

    kernel = functools.partial(
        _conv_seqnorm_relu_kernel, k=K, cin_pad=Cin_pad, l_out_pad=L_out_pad,
        stride=stride, dilation=dilation, eps=eps)

    out = pl.pallas_call(
        kernel,
        out_shape=jax.ShapeDtypeStruct((N_pad, Cout_pad, L_out_pad), jnp.float32),
        grid_spec=pltpu.PrefetchScalarGridSpec(
            num_scalar_prefetch=0,
            grid=(num_tiles,),
            in_specs=[
                # NOTE: if profiling shows exposed DMA, add pipeline_mode=pl.Buffered(3)
                # on this x spec (VMEM headroom is already accounted for).
                pl.BlockSpec((B_tile, Cin_pad, L_block), lambda i: (i, 0, 0)),
                pl.BlockSpec((B_tile, 1, L_out_pad), lambda i: (i, 0, 0)),
                pl.BlockSpec((B_tile, 1, 1), lambda i: (i, 0, 0)),
                pl.BlockSpec((Cout_pad, KC_pad), lambda i: (0, 0)),
                pl.BlockSpec((Cout_pad, 1), lambda i: (0, 0)),
                pl.BlockSpec((Cout_pad, 1), lambda i: (0, 0)),
            ],
            out_specs=pl.BlockSpec((B_tile, Cout_pad, L_out_pad), lambda i: (i, 0, 0)),
            scratch_shapes=[pltpu.VMEM((KC_pad, B_tile * L_out_pad), compute_dtype)],
        ),
        compiler_params=pltpu.CompilerParams(
            dimension_semantics=("parallel",),
            vmem_limit_bytes=vmem_limit),
    )(x, mask, rsum, w2t, g, b)

    # Output is already (N_pad, Cout_pad, L_out_pad): drop padding, add unit W axis.
    return out[:N, :Cout, :L_out][..., None]


# --------------------------- Pure-JAX reference ------------------------------

def reference_forward(x, mask, weight, gamma, beta,
                      *, stride=1, padding=0, dilation=1, eps=1e-6):
    y = jax.lax.conv_general_dilated(
        x, weight,
        window_strides=(stride, 1),
        padding=((padding, padding), (0, 0)),
        rhs_dilation=(dilation, 1),
        dimension_numbers=("NCHW", "OIHW", "NCHW"))
    channels = weight.shape[0]
    mask_rsum = 1.0 / (jnp.sum(mask, axis=(2, 3), keepdims=True) * channels)
    y = y * mask
    mean = jnp.sum(y, axis=(1, 2, 3), keepdims=True) * mask_rsum
    y = (y - mean) * mask
    var = jnp.sum(y * y, axis=(1, 2, 3), keepdims=True) * mask_rsum
    y = y * jax.lax.rsqrt(var + eps)
    y = y * gamma.reshape(1, -1, 1, 1) + beta.reshape(1, -1, 1, 1)
    y = jnp.maximum(y, 0.0)
    return y * mask


# ------------------------------- Main -----------------------------------------

if __name__ == "__main__":
    N, Cin, Cout, L, K = 4, 4, 8, 16, 3
    stride, padding, dilation = 1, 1, 1   # "same"-length conv

    key = jax.random.PRNGKey(0)
    kx, kw = jax.random.split(key, 2)

    x = jax.random.normal(kx, (N, Cin, L, 1), dtype=jnp.float32)

    # Xavier-uniform init for conv weight (Cout, Cin, K, 1), matching nn.init.
    fan_in = Cin * K * 1
    fan_out = Cout * K * 1
    bound = (6.0 / (fan_in + fan_out)) ** 0.5
    weight = jax.random.uniform(kw, (Cout, Cin, K, 1),
                                minval=-bound, maxval=bound, dtype=jnp.float32)

    # SeqNorm affine params (default init: weight=1, bias=0)
    gamma = jnp.ones((Cout,), jnp.float32)
    beta = jnp.zeros((Cout,), jnp.float32)

    # Binary sequence masks with varying valid lengths.
    valid_len = jnp.array([L, L - 4, L - 7, L])
    pos = jnp.arange(L)[None, :]
    mask = (pos < valid_len[:, None]).astype(jnp.float32)   # (N, L)
    mask = mask[:, None, :, None]                            # (N, 1, L, 1)

    ref = reference_forward(x, mask, weight, gamma, beta,
                            stride=stride, padding=padding, dilation=dilation)
    ref = jax.block_until_ready(ref)

    # f32 matmul inputs: exact parity with the reference.
    out = conv_module_forward(x, mask, weight, gamma, beta,
                              stride=stride, padding=padding, dilation=dilation)
    out = jax.block_until_ready(out)
    assert out.shape == ref.shape == (N, Cout, L, 1)
    assert jnp.allclose(out, ref, rtol=1e-4, atol=1e-4), (
        f"f32 max abs err = {jnp.max(jnp.abs(out - ref))}")

    # bf16 matmul inputs (halved HBM traffic, native MXU rate); f32 accumulation.
    out_bf16 = conv_module_forward(x, mask, weight, gamma, beta,
                                   stride=stride, padding=padding, dilation=dilation,
                                   compute_dtype=jnp.bfloat16)
    out_bf16 = jax.block_until_ready(out_bf16)
    assert out_bf16.shape == ref.shape
    assert float(jnp.max(jnp.abs(out_bf16 - ref))) < 0.2, (
        f"bf16 max abs err = {jnp.max(jnp.abs(out_bf16 - ref))}")

    print("KERNEL_OK")
</pallas_src>

<mosaic_0001>
module attributes {stable_mosaic.version = 11 : i64} {
  func.func @_conv_seqnorm_relu_kernel(%arg0: i32, %arg1: memref<2x8x256xf32, #tpu.memory_space<vmem>>, %arg2: memref<2x1x128xf32, #tpu.memory_space<vmem>>, %arg3: memref<2x1x1xf32, #tpu.memory_space<vmem>>, %arg4: memref<8x24xf32, #tpu.memory_space<vmem>>, %arg5: memref<8x1xf32, #tpu.memory_space<vmem>>, %arg6: memref<8x1xf32, #tpu.memory_space<vmem>>, %arg7: memref<2x8x128xf32, #tpu.memory_space<vmem>>, %arg8: memref<24x256xf32, #tpu.memory_space<vmem>>) attributes {dimension_semantics = [#tpu.dimension_semantics<parallel>], iteration_bounds = array<i64: 2>, scalar_prefetch = 0 : i64, scratch_operands = 1 : i64, tpu.core_type = #tpu.core_type<tc>, window_params = [{transform_indices = @transform_0, window_bounds = array<i64: 2, 8, 256>}, {transform_indices = @transform_1, window_bounds = array<i64: 2, 1, 128>}, {transform_indices = @transform_2, window_bounds = array<i64: 2, 1, 1>}, {pipeline_mode = #tpu.pipeline_mode<synchronous>, transform_indices = @transform_3, window_bounds = array<i64: 8, 24>}, {pipeline_mode = #tpu.pipeline_mode<synchronous>, transform_indices = @transform_4, window_bounds = array<i64: 8, 1>}, {pipeline_mode = #tpu.pipeline_mode<synchronous>, transform_indices = @transform_5, window_bounds = array<i64: 8, 1>}, {transform_indices = @transform_6, window_bounds = array<i64: 2, 8, 128>}]} {
    %c0 = arith.constant 0 : index
    %c0_0 = arith.constant 0 : index
    %c0_1 = arith.constant 0 : index
    %0 = vector.load %arg1[%c0, %c0_0, %c0_1] : memref<2x8x256xf32, #tpu.memory_space<vmem>>, vector<1x8x128xf32>
    %1 = vector.shape_cast %0 : vector<1x8x128xf32> to vector<8x128xf32>
    %c0_2 = arith.constant 0 : index
    %c0_3 = arith.constant 0 : index
    %2 = vector.load %arg8[%c0_2, %c0_3] : memref<24x256xf32, #tpu.memory_space<vmem>>, vector<8x128xf32>
    tpu.vector_store %arg8[%c0_2, %c0_3], %1 {strides = array<i32>} : memref<24x256xf32, #tpu.memory_space<vmem>>, vector<8x128xf32>,
    %c0_4 = arith.constant 0 : index
    %c0_5 = arith.constant 0 : index
    %c1 = arith.constant 1 : index
    %3 = vector.load %arg1[%c0_4, %c0_5, %c1] : memref<2x8x256xf32, #tpu.memory_space<vmem>>, vector<1x8x128xf32>
    %4 = vector.shape_cast %3 : vector<1x8x128xf32> to vector<8x128xf32>
    %c8 = arith.constant 8 : index
    %c0_6 = arith.constant 0 : index
    %5 = vector.load %arg8[%c8, %c0_6] : memref<24x256xf32, #tpu.memory_space<vmem>>, vector<8x128xf32>
    tpu.vector_store %arg8[%c8, %c0_6], %4 {strides = array<i32>} : memref<24x256xf32, #tpu.memory_space<vmem>>, vector<8x128xf32>,
    %c0_7 = arith.constant 0 : index
    %c0_8 = arith.constant 0 : index
    %c2 = arith.constant 2 : index
    %6 = vector.load %arg1[%c0_7, %c0_8, %c2] : memref<2x8x256xf32, #tpu.memory_space<vmem>>, vector<1x8x128xf32>
    %7 = vector.shape_cast %6 : vector<1x8x128xf32> to vector<8x128xf32>
    %c16 = arith.constant 16 : index
    %c0_9 = arith.constant 0 : index
    %8 = vector.load %arg8[%c16, %c0_9] : memref<24x256xf32, #tpu.memory_space<vmem>>, vector<8x128xf32>
    tpu.vector_store %arg8[%c16, %c0_9], %7 {strides = array<i32>} : memref<24x256xf32, #tpu.memory_space<vmem>>, vector<8x128xf32>,
    %c1_10 = arith.constant 1 : index
    %c0_11 = arith.constant 0 : index
    %c0_12 = arith.constant 0 : index
    %9 = vector.load %arg1[%c1_10, %c0_11, %c0_12] : memref<2x8x256xf32, #tpu.memory_space<vmem>>, vector<1x8x128xf32>
    %10 = vector.shape_cast %9 : vector<1x8x128xf32> to vector<8x128xf32>
    %c0_13 = arith.constant 0 : index
    %c128 = arith.constant 128 : index
    %11 = vector.load %arg8[%c0_13, %c128] : memref<24x256xf32, #tpu.memory_space<vmem>>, vector<8x128xf32>
    tpu.vector_store %arg8[%c0_13, %c128], %10 {strides = array<i32>} : memref<24x256xf32, #tpu.memory_space<vmem>>, vector<8x128xf32>,
    %c1_14 = arith.constant 1 : index
    %c0_15 = arith.constant 0 : index
    %c1_16 = arith.constant 1 : index
    %12 = vector.load %arg1[%c1_14, %c0_15, %c1_16] : memref<2x8x256xf32, #tpu.memory_space<vmem>>, vector<1x8x128xf32>
    %13 = vector.shape_cast %12 : vector<1x8x128xf32> to vector<8x128xf32>
    %c8_17 = arith.constant 8 : index
    %c128_18 = arith.constant 128 : index
    %14 = vector.load %arg8[%c8_17, %c128_18] : memref<24x256xf32, #tpu.memory_space<vmem>>, vector<8x128xf32>
    tpu.vector_store %arg8[%c8_17, %c128_18], %13 {strides = array<i32>} : memref<24x256xf32, #tpu.memory_space<vmem>>, vector<8x128xf32>,
    %c1_19 = arith.constant 1 : index
    %c0_20 = arith.constant 0 : index
    %c2_21 = arith.constant 2 : index
    %15 = vector.load %arg1[%c1_19, %c0_20, %c2_21] : memref<2x8x256xf32, #tpu.memory_space<vmem>>, vector<1x8x128xf32>
    %16 = vector.shape_cast %15 : vector<1x8x128xf32> to vector<8x128xf32>
    %c16_22 = arith.constant 16 : index
    %c128_23 = arith.constant 128 : index
    %17 = vector.load %arg8[%c16_22, %c128_23] : memref<24x256xf32, #tpu.memory_space<vmem>>, vector<8x128xf32>
    tpu.vector_store %arg8[%c16_22, %c128_23], %16 {strides = array<i32>} : memref<24x256xf32, #tpu.memory_space<vmem>>, vector<8x128xf32>,
    %c0_24 = arith.constant 0 : index
    %c0_25 = arith.constant 0 : index
    %18 = vector.load %arg4[%c0_24, %c0_25] : memref<8x24xf32, #tpu.memory_space<vmem>>, vector<8x24xf32>
    %c0_26 = arith.constant 0 : index
    %c0_27 = arith.constant 0 : index
    %19 = vector.load %arg8[%c0_26, %c0_27] : memref<24x256xf32, #tpu.memory_space<vmem>>, vector<24x256xf32>
    %cst = arith.constant dense<0.000000e+00> : vector<8x256xf32>
    %20 = tpu.matmul %18, %19, %cst {dimension_numbers = #tpu.dot_dimension_numbers<[1], [0], [0], [1], [0, 0, 1, 1], [], []>} : vector<8x24xf32>, vector<24x256xf32>, vector<8x256xf32> -> vector<8x256xf32>
    %c0_28 = arith.constant 0 : index
    %c0_29 = arith.constant 0 : index
    %21 = vector.load %arg5[%c0_28, %c0_29] : memref<8x1xf32, #tpu.memory_space<vmem>>, vector<8x1xf32>
    %c0_30 = arith.constant 0 : index
    %c0_31 = arith.constant 0 : index
    %22 = vector.load %arg6[%c0_30, %c0_31] : memref<8x1xf32, #tpu.memory_space<vmem>>, vector<8x1xf32>
    %c0_32 = arith.constant 0 : index
    %c0_33 = arith.constant 0 : index
    %c0_34 = arith.constant 0 : index
    %23 = vector.load %arg2[%c0_32, %c0_33, %c0_34] : memref<2x1x128xf32, #tpu.memory_space<vmem>>, vector<1x1x128xf32>
    %24 = vector.shape_cast %23 : vector<1x1x128xf32> to vector<1x128xf32>
    %c0_35 = arith.constant 0 : index
    %c0_36 = arith.constant 0 : index
    %c0_37 = arith.constant 0 : index
    %25 = vector.load %arg3[%c0_35, %c0_36, %c0_37] : memref<2x1x1xf32, #tpu.memory_space<vmem>>, vector<1x1x1xf32>
    %26 = vector.shape_cast %25 : vector<1x1x1xf32> to vector<1x1xf32>
    %27 = vector.extract_strided_slice %20 {offsets = [0, 0], sizes = [8, 128], strides = [1, 1]} : vector<8x256xf32> to vector<8x128xf32>
    %28 = vector.broadcast %24 : vector<1x128xf32> to vector<8x128xf32>
    %29 = arith.mulf %27, %28 : vector<8x128xf32>
    %30 = vector.shape_cast %29 : vector<8x128xf32> to vector<1x8x128xf32>
    %cst_38 = arith.constant dense<0.000000e+00> : vector<1xf32>
    %31 = vector.multi_reduction <add>, %30, %cst_38 [1, 2] : vector<1x8x128xf32> to vector<1xf32>
    %32 = vector.shape_cast %31 : vector<1xf32> to vector<1x1x1xf32>
    %33 = vector.extract %32[0, 0, 0] : f32 from vector<1x1x1xf32>
    %34 = vector.broadcast %33 : f32 to vector<1x1xf32>
    %35 = arith.mulf %34, %26 : vector<1x1xf32>
    %36 = arith.mulf %29, %29 : vector<8x128xf32>
    %37 = vector.shape_cast %36 : vector<8x128xf32> to vector<1x8x128xf32>
    %cst_39 = arith.constant dense<0.000000e+00> : vector<1xf32>
    %38 = vector.multi_reduction <add>, %37, %cst_39 [1, 2] : vector<1x8x128xf32> to vector<1xf32>
    %39 = vector.shape_cast %38 : vector<1xf32> to vector<1x1x1xf32>
    %40 = vector.extract %39[0, 0, 0] : f32 from vector<1x1x1xf32>
    %41 = vector.broadcast %40 : f32 to vector<1x1xf32>
    %42 = arith.mulf %41, %26 : vector<1x1xf32>
    %43 = arith.mulf %35, %35 : vector<1x1xf32>
    %44 = arith.subf %42, %43 : vector<1x1xf32>
    %cst_40 = arith.constant 0.000000e+00 : f32
    %45 = vector.broadcast %cst_40 : f32 to vector<1x1xf32>
    %46 = arith.maximumf %44, %45 : vector<1x1xf32>
    %47 = vector.broadcast %35 : vector<1x1xf32> to vector<8x128xf32>
    %48 = arith.subf %29, %47 : vector<8x128xf32>
    %cst_41 = arith.constant 9.99999997E-7 : f32
    %49 = vector.broadcast %cst_41 : f32 to vector<1x1xf32>
    %50 = arith.addf %46, %49 : vector<1x1xf32>
    %51 = math.rsqrt %50 : vector<1x1xf32>
    %52 = vector.broadcast %51 : vector<1x1xf32> to vector<8x128xf32>
    %53 = arith.mulf %48, %52 : vector<8x128xf32>
    %54 = vector.broadcast %21 : vector<8x1xf32> to vector<8x128xf32>
    %55 = arith.mulf %53, %54 : vector<8x128xf32>
    %56 = vector.broadcast %22 : vector<8x1xf32> to vector<8x128xf32>
    %57 = arith.addf %55, %56 : vector<8x128xf32>
    %cst_42 = arith.constant 0.000000e+00 : f32
    %58 = vector.broadcast %cst_42 : f32 to vector<8x128xf32>
    %59 = arith.maximumf %57, %58 : vector<8x128xf32>
    %60 = vector.broadcast %24 : vector<1x128xf32> to vector<8x128xf32>
    %61 = arith.mulf %59, %60 : vector<8x128xf32>
    %c0_43 = arith.constant 0 : index
    %c0_44 = arith.constant 0 : index
    %c0_45 = arith.constant 0 : index
    %62 = vector.load %arg7[%c0_43, %c0_44, %c0_45] : memref<2x8x128xf32, #tpu.memory_space<vmem>>, vector<1x8x128xf32>
    %63 = vector.shape_cast %62 : vector<1x8x128xf32> to vector<8x128xf32>
    %64 = vector.shape_cast %61 : vector<8x128xf32> to vector<1x8x128xf32>
    tpu.vector_store %arg7[%c0_43, %c0_44, %c0_45], %64 {strides = array<i32>} : memref<2x8x128xf32, #tpu.memory_space<vmem>>, vector<1x8x128xf32>,
    %c1_46 = arith.constant 1 : index
    %c0_47 = arith.constant 0 : index
    %c0_48 = arith.constant 0 : index
    %65 = vector.load %arg2[%c1_46, %c0_47, %c0_48] : memref<2x1x128xf32, #tpu.memory_space<vmem>>, vector<1x1x128xf32>
    %66 = vector.shape_cast %65 : vector<1x1x128xf32> to vector<1x128xf32>
    %c1_49 = arith.constant 1 : index
    %c0_50 = arith.constant 0 : index
    %c0_51 = arith.constant 0 : index
    %67 = vector.load %arg3[%c1_49, %c0_50, %c0_51] : memref<2x1x1xf32, #tpu.memory_space<vmem>>, vector<1x1x1xf32>
    %68 = vector.shape_cast %67 : vector<1x1x1xf32> to vector<1x1xf32>
    %69 = vector.extract_strided_slice %20 {offsets = [0, 128], sizes = [8, 128], strides = [1, 1]} : vector<8x256xf32> to vector<8x128xf32>
    %70 = vector.broadcast %66 : vector<1x128xf32> to vector<8x128xf32>
    %71 = arith.mulf %69, %70 : vector<8x128xf32>
    %72 = vector.shape_cast %71 : vector<8x128xf32> to vector<1x8x128xf32>
    %cst_52 = arith.constant dense<0.000000e+00> : vector<1xf32>
    %73 = vector.multi_reduction <add>, %72, %cst_52 [1, 2] : vector<1x8x128xf32> to vector<1xf32>
    %74 = vector.shape_cast %73 : vector<1xf32> to vector<1x1x1xf32>
    %75 = vector.extract %74[0, 0, 0] : f32 from vector<1x1x1xf32>
    %76 = vector.broadcast %75 : f32 to vector<1x1xf32>
    %77 = arith.mulf %76, %68 : vector<1x1xf32>
    %78 = arith.mulf %71, %71 : vector<8x128xf32>
    %79 = vector.shape_cast %78 : vector<8x128xf32> to vector<1x8x128xf32>
    %cst_53 = arith.constant dense<0.000000e+00> : vector<1xf32>
    %80 = vector.multi_reduction <add>, %79, %cst_53 [1, 2] : vector<1x8x128xf32> to vector<1xf32>
    %81 = vector.shape_cast %80 : vector<1xf32> to vector<1x1x1xf32>
    %82 = vector.extract %81[0, 0, 0] : f32 from vector<1x1x1xf32>
    %83 = vector.broadcast %82 : f32 to vector<1x1xf32>
    %84 = arith.mulf %83, %68 : vector<1x1xf32>
    %85 = arith.mulf %77, %77 : vector<1x1xf32>
    %86 = arith.subf %84, %85 : vector<1x1xf32>
    %cst_54 = arith.constant 0.000000e+00 : f32
    %87 = vector.broadcast %cst_54 : f32 to vector<1x1xf32>
    %88 = arith.maximumf %86, %87 : vector<1x1xf32>
    %89 = vector.broadcast %77 : vector<1x1xf32> to vector<8x128xf32>
    %90 = arith.subf %71, %89 : vector<8x128xf32>
    %cst_55 = arith.constant 9.99999997E-7 : f32
    %91 = vector.broadcast %cst_55 : f32 to vector<1x1xf32>
    %92 = arith.addf %88, %91 : vector<1x1xf32>
    %93 = math.rsqrt %92 : vector<1x1xf32>
    %94 = vector.broadcast %93 : vector<1x1xf32> to vector<8x128xf32>
    %95 = arith.mulf %90, %94 : vector<8x128xf32>
    %96 = vector.broadcast %21 : vector<8x1xf32> to vector<8x128xf32>
    %97 = arith.mulf %95, %96 : vector<8x128xf32>
    %98 = vector.broadcast %22 : vector<8x1xf32> to vector<8x128xf32>
    %99 = arith.addf %97, %98 : vector<8x128xf32>
    %cst_56 = arith.constant 0.000000e+00 : f32
    %100 = vector.broadcast %cst_56 : f32 to vector<8x128xf32>
    %101 = arith.maximumf %99, %100 : vector<8x128xf32>
    %102 = vector.broadcast %66 : vector<1x128xf32> to vector<8x128xf32>
    %103 = arith.mulf %101, %102 : vector<8x128xf32>
    %c1_57 = arith.constant 1 : index
    %c0_58 = arith.constant 0 : index
    %c0_59 = arith.constant 0 : index
    %104 = vector.load %arg7[%c1_57, %c0_58, %c0_59] : memref<2x8x128xf32, #tpu.memory_space<vmem>>, vector<1x8x128xf32>
    %105 = vector.shape_cast %104 : vector<1x8x128xf32> to vector<8x128xf32>
    %106 = vector.shape_cast %103 : vector<8x128xf32> to vector<1x8x128xf32>
    tpu.vector_store %arg7[%c1_57, %c0_58, %c0_59], %106 {strides = array<i32>} : memref<2x8x128xf32, #tpu.memory_space<vmem>>, vector<1x8x128xf32>,
    return
  }
  func.func @transform_0(%arg0: i32) -> (i32, i32, i32) {
    %c0_i32 = arith.constant 0 : i32
    %c0_i32_0 = arith.constant 0 : i32
    %c0_i32_1 = arith.constant 0 : i32
    return %arg0, %c0_i32, %c0_i32_0 : i32, i32, i32
  }
  func.func @transform_1(%arg0: i32) -> (i32, i32, i32) {
    %c0_i32 = arith.constant 0 : i32
    %c0_i32_0 = arith.constant 0 : i32
    %c0_i32_1 = arith.constant 0 : i32
    return %arg0, %c0_i32, %c0_i32_0 : i32, i32, i32
  }
  func.func @transform_2(%arg0: i32) -> (i32, i32, i32) {
    %c0_i32 = arith.constant 0 : i32
    %c0_i32_0 = arith.constant 0 : i32
    %c0_i32_1 = arith.constant 0 : i32
    return %arg0, %c0_i32, %c0_i32_0 : i32, i32, i32
  }
  func.func @transform_3(%arg0: i32) -> (i32, i32) {
    %c0_i32 = arith.constant 0 : i32
    %c0_i32_0 = arith.constant 0 : i32
    %c0_i32_1 = arith.constant 0 : i32
    return %c0_i32, %c0_i32_0 : i32, i32
  }
  func.func @transform_4(%arg0: i32) -> (i32, i32) {
    %c0_i32 = arith.constant 0 : i32
    %c0_i32_0 = arith.constant 0 : i32
    %c0_i32_1 = arith.constant 0 : i32
    return %c0_i32, %c0_i32_0 : i32, i32
  }
  func.func @transform_5(%arg0: i32) -> (i32, i32) {
    %c0_i32 = arith.constant 0 : i32
    %c0_i32_0 = arith.constant 0 : i32
    %c0_i32_1 = arith.constant 0 : i32
    return %c0_i32, %c0_i32_0 : i32, i32
  }
  func.func @transform_6(%arg0: i32) -> (i32, i32, i32) {
    %c0_i32 = arith.constant 0 : i32
    %c0_i32_0 = arith.constant 0 : i32
    %c0_i32_1 = arith.constant 0 : i32
    return %arg0, %c0_i32, %c0_i32_0 : i32, i32, i32
  }
}

</mosaic_0001>

<llo_original>
// kernel: tpu_custom_call.1
$region0: #{tpu_custom_call.1}
  #allocation0 [shape = 'u32[]', space=smem, size = 0x4, offset = 0x4, fixed_abs, tag = 'smem constant byte address 0x4 - core index']
  #allocation1 [shape = 'u32[144,128]{1,0:T(1,128)}', space=vmem, size = 0x12000, scoped, tag = 'internal scratch']
  #allocation2 [shape = 'f32[24,256]{1,0:T(8,128)}', space=vmem, size = 0x6000, scoped, tag = 'scratch operand']
  %s0 = inlined_call_operand.hbm [shape: f32[4,8,256], index: 0, kind: input, shape index: {}]
  %s1 = inlined_call_operand.vmem [shape: f32[4,1,128], index: 1, kind: input, shape index: {}]
  %s2 = inlined_call_operand.vmem [shape: f32[4,1,1], index: 2, kind: input, shape index: {}]
  %s3 = inlined_call_operand.vmem [shape: f32[8,24], index: 3, kind: input, shape index: {}]
  %s4 = inlined_call_operand.vmem [shape: f32[8,1], index: 4, kind: input, shape index: {}]
  %s5 = inlined_call_operand.vmem [shape: f32[8,1], index: 5, kind: input, shape index: {}]
  %s6 = inlined_call_operand.hbm [shape: f32[4,8,128], index: 6, kind: output, shape index: {}]
  %s7 = sld [smem:[#allocation0]]
  $region61: #{tpu_custom_call.1} parent=0
    _
  %s9 = ssub.s32 1, %s7
  %s10 = scalar_select 0, %s9, %s7
  $region1: #{tpu_custom_call.1} parent=0
    #allocation3 [shape = 'u8[32768]{0}', space=vmem, size = 0x8000, scoped, tag = 'input window, operand 0']
    #allocation4 [shape = 's32[2]{0}', space=sflag, size = 0x8, scoped, tag = 'scoped memory for tpu_custom_call.1']
    #allocation5 [shape = 's32[2]{0}', space=sflag, size = 0x8, scoped, tag = 'scoped memory for tpu_custom_call.1']
    #allocation6 [shape = 'u8[16384]{0}', space=vmem, size = 0x4000, scoped, tag = 'output window, operand 0']
    %11 = vsyncpa [#allocation4], 0
    %s12 = scalar_lea.sflag [#allocation4], 1
    %13 = vsyncpa %s12, 0
    %14 = vsyncpa [#allocation5], 0
    %s15 = scalar_lea.sflag [#allocation5], 1
    %16 = vsyncpa %s15, 0
    loop: start=0, step=1, limit=4
    $region2: #{tpu_custom_call.1} parent=1 // loop_pre_header
      _
    $region3: #{tpu_custom_call.1} parent=1 // loop_header
      %s18 = sphi 0, %s22
      %p19 = scmp.ge.s32.totalorder %s18, 4
      %s28 = sphi 0, %s30
      %s31 = sphi 0, %s28
      %s32 = sphi 0, %s31
      %s48 = sphi 0, %s32
      %s54 = sphi 0, %s56
      %s57 = sphi 0, %s54
      %s58 = sphi 0, %s57
      %s74 = sphi 0, %s58
      %s80 = sphi 0, %s82
      %s83 = sphi 0, %s80
      %s84 = sphi 0, %s83
      %s100 = sphi 0, %s84
      %s104 = sphi 0, %s104
      %s106 = sphi 0, %s104
      %s107 = sphi 0, %s106
      %s121 = sphi 0, %s107
      %s125 = sphi 0, %s125
      %s127 = sphi 0, %s125
      %s128 = sphi 0, %s127
      %s142 = sphi 0, %s128
      %s146 = sphi 0, %s146
      %s148 = sphi 0, %s146
      %s149 = sphi 0, %s148
      %s163 = sphi 0, %s149
      %s169 = sphi 0, %s171
      %s172 = sphi 0, %s169
      %s173 = sphi 0, %s172
      %s189 = sphi 0, %s173
    $region4: #{tpu_custom_call.1} parent=1 // loop_header_branch
      %21 = sbr.rel (%p19) target = $region8
    $region5: #{tpu_custom_call.1} parent=1 // loop_body
      %s23 = ssub.s32 %s18, 1
      %s24 = ssub.s32 %s18, 2
      %s25 = sadd.s32 %s18, 1
      %s26 = ssub.s32 %s18, %s25
      %p27 = scmp.eq.s32.totalorder %s26, 0
      %s29 = sadd.s32 %s28, 1
      %s30 = scalar_select %p27, %s28, %s29
      %p33 = pneg %p27
      %p34 = scmp.eq.s32.totalorder %s18, 1
      %p35 = por %p33, %p34
      %p36 = scmp.ne.s32.totalorder %s28, %s31
      %p37 = scmp.eq.s32.totalorder %s18, 0
      %p38 = por %p36, %p37
      %p39 = scmp.ne.s32.totalorder %s28, %s31
      %p40 = scmp.eq.s32.totalorder %s23, 1
      %p41 = por %p39, %p40
      %p42 = scmp.ne.s32.totalorder %s31, %s32
      %p43 = scmp.eq.s32.totalorder %s23, 0
      %p44 = por %p42, %p43
      %p45 = scmp.ne.s32.totalorder %s31, %s32
      %p46 = scmp.eq.s32.totalorder %s24, 1
      %p47 = por %p45, %p46
      %p49 = scmp.ne.s32.totalorder %s32, %s48
      %p50 = scmp.eq.s32.totalorder %s24, 0
      %p51 = por %p49, %p50
      %s52 = ssub.s32 %s18, %s25
      %p53 = scmp.eq.s32.totalorder %s52, 0
      %s55 = sadd.s32 %s54, 1
      %s56 = scalar_select %p53, %s54, %s55
      %p59 = pneg %p53
      %p60 = scmp.eq.s32.totalorder %s18, 1
      %p61 = por %p59, %p60
      %p62 = scmp.ne.s32.totalorder %s54, %s57
      %p63 = scmp.eq.s32.totalorder %s18, 0
      %p64 = por %p62, %p63
      %p65 = scmp.ne.s32.totalorder %s54, %s57
      %p66 = scmp.eq.s32.totalorder %s23, 1
      %p67 = por %p65, %p66
      %p68 = scmp.ne.s32.totalorder %s57, %s58
      %p69 = scmp.eq.s32.totalorder %s23, 0
      %p70 = por %p68, %p69
      %p71 = scmp.ne.s32.totalorder %s57, %s58
      %p72 = scmp.eq.s32.totalorder %s24, 1
      %p73 = por %p71, %p72
      %p75 = scmp.ne.s32.totalorder %s58, %s74
      %p76 = scmp.eq.s32.totalorder %s24, 0
      %p77 = por %p75, %p76
      %s78 = ssub.s32 %s18, %s25
      %p79 = scmp.eq.s32.totalorder %s78, 0
      %s81 = sadd.s32 %s80, 1
      %s82 = scalar_select %p79, %s80, %s81
      %p85 = pneg %p79
      %p86 = scmp.eq.s32.totalorder %s18, 1
      %p87 = por %p85, %p86
      %p88 = scmp.ne.s32.totalorder %s80, %s83
      %p89 = scmp.eq.s32.totalorder %s18, 0
      %p90 = por %p88, %p89
      %p91 = scmp.ne.s32.totalorder %s80, %s83
      %p92 = scmp.eq.s32.totalorder %s23, 1
      %p93 = por %p91, %p92
      %p94 = scmp.ne.s32.totalorder %s83, %s84
      %p95 = scmp.eq.s32.totalorder %s23, 0
      %p96 = por %p94, %p95
      %p97 = scmp.ne.s32.totalorder %s83, %s84
      %p98 = scmp.eq.s32.totalorder %s24, 1
      %p99 = por %p97, %p98
      %p101 = scmp.ne.s32.totalorder %s84, %s100
      %p102 = scmp.eq.s32.totalorder %s24, 0
      %p103 = por %p101, %p102
      %s105 = sadd.s32 %s104, 1
      %p108 = scmp.eq.s32.totalorder %s18, 1
      %p109 = scmp.ne.s32.totalorder %s104, %s106
      %p110 = scmp.eq.s32.totalorder %s18, 0
      %p111 = por %p109, %p110
      %p112 = scmp.ne.s32.totalorder %s104, %s106
      %p113 = scmp.eq.s32.totalorder %s23, 1
      %p114 = por %p112, %p113
      %p115 = scmp.ne.s32.totalorder %s106, %s107
      %p116 = scmp.eq.s32.totalorder %s23, 0
      %p117 = por %p115, %p116
      %p118 = scmp.ne.s32.totalorder %s106, %s107
      %p119 = scmp.eq.s32.totalorder %s24, 1
      %p120 = por %p118, %p119
      %p122 = scmp.ne.s32.totalorder %s107, %s121
      %p123 = scmp.eq.s32.totalorder %s24, 0
      %p124 = por %p122, %p123
      %s126 = sadd.s32 %s125, 1
      %p129 = scmp.eq.s32.totalorder %s18, 1
      %p130 = scmp.ne.s32.totalorder %s125, %s127
      %p131 = scmp.eq.s32.totalorder %s18, 0
      %p132 = por %p130, %p131
      %p133 = scmp.ne.s32.totalorder %s125, %s127
      %p134 = scmp.eq.s32.totalorder %s23, 1
      %p135 = por %p133, %p134
      %p136 = scmp.ne.s32.totalorder %s127, %s128
      %p137 = scmp.eq.s32.totalorder %s23, 0
      %p138 = por %p136, %p137
      %p139 = scmp.ne.s32.totalorder %s127, %s128
      %p140 = scmp.eq.s32.totalorder %s24, 1
      %p141 = por %p139, %p140
      %p143 = scmp.ne.s32.totalorder %s128, %s142
      %p144 = scmp.eq.s32.totalorder %s24, 0
      %p145 = por %p143, %p144
      %s147 = sadd.s32 %s146, 1
      %p150 = scmp.eq.s32.totalorder %s18, 1
      %p151 = scmp.ne.s32.totalorder %s146, %s148
      %p152 = scmp.eq.s32.totalorder %s18, 0
      %p153 = por %p151, %p152
      %p154 = scmp.ne.s32.totalorder %s146, %s148
      %p155 = scmp.eq.s32.totalorder %s23, 1
      %p156 = por %p154, %p155
      %p157 = scmp.ne.s32.totalorder %s148, %s149
      %p158 = scmp.eq.s32.totalorder %s23, 0
      %p159 = por %p157, %p158
      %p160 = scmp.ne.s32.totalorder %s148, %s149
      %p161 = scmp.eq.s32.totalorder %s24, 1
      %p162 = por %p160, %p161
      %p164 = scmp.ne.s32.totalorder %s149, %s163
      %p165 = scmp.eq.s32.totalorder %s24, 0
      %p166 = por %p164, %p165
      %s167 = ssub.s32 %s18, %s25
      %p168 = scmp.eq.s32.totalorder %s167, 0
      %s170 = sadd.s32 %s169, 1
      %s171 = scalar_select %p168, %s169, %s170
      %p174 = pneg %p168
      %p175 = scmp.eq.s32.totalorder %s18, 1
      %p176 = por %p174, %p175
      %p177 = scmp.ne.s32.totalorder %s169, %s172
      %p178 = scmp.eq.s32.totalorder %s18, 0
      %p179 = por %p177, %p178
      %p180 = scmp.ne.s32.totalorder %s169, %s172
      %p181 = scmp.eq.s32.totalorder %s23, 1
      %p182 = por %p180, %p181
      %p183 = scmp.ne.s32.totalorder %s172, %s173
      %p184 = scmp.eq.s32.totalorder %s23, 0
      %p185 = por %p183, %p184
      %p186 = scmp.ne.s32.totalorder %s172, %s173
      %p187 = scmp.eq.s32.totalorder %s24, 1
      %p188 = por %p186, %p187
      %p190 = scmp.ne.s32.totalorder %s173, %s189
      %p191 = scmp.eq.s32.totalorder %s24, 0
      %p192 = por %p190, %p191
      %p193 = scmp.le.s32.totalorder 1, %s18
      %p194 = scmp.lt.s32.totalorder %s18, 3
      %p195 = pnand %p193, %p194
      %p196 = pneg %p195
      // Predicated region
      $region9: #{tpu_custom_call.1} parent=5 // pred_check
        _
      $region10: #{tpu_custom_call.1} parent=5 // pred_check_branch
        %198 = sbr.rel (%p195) target = $region12
      $region11: #{tpu_custom_call.1} parent=5 // pred_region
        %s199 = ssub.s32 %s18, 1
        // Predicated region
        $region13: #{tpu_custom_call.1} parent=11 // pred_check
          %p200 = pneg %p117
        $region14: #{tpu_custom_call.1} parent=11 // pred_check_branch
          %202 = sbr.rel (%p200) target = $region16
        $region15: #{tpu_custom_call.1} parent=11 // pred_region
          _
        $region16: #{tpu_custom_call.1} parent=11 // pred_fallthru
          _
        // Predicated region
        $region17: #{tpu_custom_call.1} parent=11 // pred_check
          %p203 = pneg %p138
        $region18: #{tpu_custom_call.1} parent=11 // pred_check_branch
          %205 = sbr.rel (%p203) target = $region20
        $region19: #{tpu_custom_call.1} parent=11 // pred_region
          _
        $region20: #{tpu_custom_call.1} parent=11 // pred_fallthru
          _
        // Predicated region
        $region21: #{tpu_custom_call.1} parent=11 // pred_check
          %p206 = pneg %p159
        $region22: #{tpu_custom_call.1} parent=11 // pred_check_branch
          %208 = sbr.rel (%p206) target = $region24
        $region23: #{tpu_custom_call.1} parent=11 // pred_region
          _
        $region24: #{tpu_custom_call.1} parent=11 // pred_fallthru
          _
      $region12: #{tpu_custom_call.1} parent=5 // pred_fallthru
        _
      %p209 = scmp.lt.s32.totalorder %s18, 2
      // Predicated region
      $region25: #{tpu_custom_call.1} parent=5 // pred_check
        %p210 = pneg %p209
      $region26: #{tpu_custom_call.1} parent=5 // pred_check_branch
        %212 = sbr.rel (%p210) target = $region28
      $region27: #{tpu_custom_call.1} parent=5 // pred_region
        // Predicated region
        $region29: #{tpu_custom_call.1} parent=27 // pred_check
          %p213 = pneg %p38
        $region30: #{tpu_custom_call.1} parent=27 // pred_check_branch
          %215 = sbr.rel (%p213) target = $region32
        $region31: #{tpu_custom_call.1} parent=27 // pred_region
          %s216 = sand.u32 %s28, 1
          %s217 = scalar_lea.sflag [#allocation4], %s216
          %s218 = sand.u32 %s28, 1
          %s219 = smul.addr %s218, 32
          %s220 = scalar_lea.vmem [#allocation3], %s219
          %s221 = smul.u32 2, %s18
          %s223 = ssub.s32 512, 512
          %224 = vsyncadd %s217, %s223
          %s225 = smul.addr %s221, 2
          %s226 = smul.addr %s225, 128
          %s227 = scalar_lea.hbm %s0, %s226
          %s228 = sshll.u32 %s220, 4
          %s229 = int_to_ptr.vmem [resolvable:$true] %s228
          %234 = dma.hbm_to_vmem [thread:$0]  %s227, 512, %s229, %s217, 256, 256, 16
        $region32: #{tpu_custom_call.1} parent=27 // pred_fallthru
          _
        // Predicated region
        $region33: #{tpu_custom_call.1} parent=27 // pred_check
          %p235 = pneg %p64
        $region34: #{tpu_custom_call.1} parent=27 // pred_check_branch
          %237 = sbr.rel (%p235) target = $region36
        $region35: #{tpu_custom_call.1} parent=27 // pred_region
          %s238 = smul.u32 2, %s18
          %p239 = scmp.lt.s32.totalorder %s238, 3
          %s240 = scalar_select %p239, %s238, 3
          %s241 = scalar_lea.vmem %s1, %s240
          %s242 = smul.u32 2, %s18
        $region36: #{tpu_custom_call.1} parent=27 // pred_fallthru
          _
        // Predicated region
        $region37: #{tpu_custom_call.1} parent=27 // pred_check
          %p243 = pneg %p90
        $region38: #{tpu_custom_call.1} parent=27 // pred_check_branch
          %245 = sbr.rel (%p243) target = $region40
        $region39: #{tpu_custom_call.1} parent=27 // pred_region
          %s246 = smul.u32 2, %s18
          %p247 = scmp.lt.s32.totalorder %s246, 3
          %s248 = scalar_select %p247, %s246, 3
          %s249 = scalar_lea.vmem %s2, %s248
          %s250 = smul.u32 2, %s18
        $region40: #{tpu_custom_call.1} parent=27 // pred_fallthru
          _
      $region28: #{tpu_custom_call.1} parent=5 // pred_fallthru
        _
      %p251 = scmp.le.s32.totalorder 1, %s18
      %p252 = scmp.lt.s32.totalorder %s18, 3
      %p253 = pnand %p251, %p252
      %p254 = pneg %p253
      // Predicated region
      $region41: #{tpu_custom_call.1} parent=5 // pred_check
        _
      $region42: #{tpu_custom_call.1} parent=5 // pred_check_branch
        %256 = sbr.rel (%p253) target = $region44
      $region43: #{tpu_custom_call.1} parent=5 // pred_region
        %s257 = ssub.s32 %s18, 1
        %s258 = sand.u32 %s31, 1
        %s259 = scalar_lea.sflag [#allocation4], %s258
        %s260 = sand.u32 %s31, 1
        %s261 = smul.addr %s260, 32
        %s262 = scalar_lea.vmem [#allocation3], %s261
        // Predicated region
        $region45: #{tpu_custom_call.1} parent=43 // pred_check
          %p263 = pneg %p44
        $region46: #{tpu_custom_call.1} parent=43 // pred_check_branch
          %265 = sbr.rel (%p263) target = $region48
        $region47: #{tpu_custom_call.1} parent=43 // pred_region
          %266 = dma.done %s259, 512
        $region48: #{tpu_custom_call.1} parent=43 // pred_fallthru
          _
        %s267 = sand.u32 %s31, 1
        %s268 = scalar_lea.sflag [#allocation4], %s267
        %s269 = sand.u32 %s31, 1
        %s270 = smul.addr %s269, 32
        %s271 = scalar_lea.vmem [#allocation3], %s270
        %p272 = pneg %p44
        %p273 = pneg %p41
        %s274 = smul.u32 2, %s23
        %p275 = scmp.lt.s32.totalorder %s274, 3
        %s276 = scalar_select %p275, %s274, 3
        %s277 = scalar_lea.vmem %s1, %s276
        %p278 = pneg %p70
        %p279 = pneg %p67
        %s280 = smul.u32 2, %s23
        %p281 = scmp.lt.s32.totalorder %s280, 3
        %s282 = scalar_select %p281, %s280, 3
        %s283 = scalar_lea.vmem %s2, %s282
        %p284 = pneg %p96
        %p285 = pneg %p93
        %p286 = pneg %p117
        %p287 = pneg %p114
        %p288 = pneg %p138
        %p289 = pneg %p135
        %p290 = pneg %p159
        %p291 = pneg %p156
        %p292 = pneg %p185
        %p293 = pneg %p182
        %s294 = sand.u32 %s172, 1
        %s295 = scalar_lea.sflag [#allocation5], %s294
        %s296 = sand.u32 %s172, 1
        %s297 = smul.addr %s296, 16
        %s298 = scalar_lea.vmem [#allocation6], %s297
        %s299 = smul.u32 2, %s23
        %s300 = smul.u32 2, %s23
        %p301 = scmp.lt.s32.totalorder %s300, 3
        %s302 = scalar_select %p301, %s300, 3
        %s303 = scalar_lea.vmem %s1, %s302
        %s304 = smul.u32 2, %s23
        %s305 = smul.u32 2, %s23
        %p306 = scmp.lt.s32.totalorder %s305, 3
        %s307 = scalar_select %p306, %s305, 3
        %s308 = scalar_lea.vmem %s2, %s307
        %s309 = smul.u32 2, %s23
        %s310 = smul.u32 2, %s23
        %v311 = vld [vmem:[%s262] sm:$0xff]
        %312 = vst [vmem:[#allocation2] sm:$0xff] %v311
        %v313 = vld [vmem:[%s262] sm:$0xff]
        %v314 = vld [vmem:[%s262 + $0x8] sm:$0xff]
        %317 = vrot.lane.b32.xlu0 %v313, 127
        %v318 = vpop.permute.xlu0 %317
        %319 = vrot.lane.b32.xlu0 %v314, 127
        %v320 = vpop.permute.xlu0 %319
        %vm321 = vcmask 1039360
        %v322 = vsel %vm321, %v318, %v320
        %324 = vst [vmem:[#allocation2 + $0x10] sm:$0xff] %v322
        %v325 = vld [vmem:[%s262] sm:$0xff]
        %v326 = vld [vmem:[%s262 + $0x8] sm:$0xff]
        %329 = vrot.lane.b32.xlu0 %v325, 126
        %v330 = vpop.permute.xlu0 %329
        %331 = vrot.lane.b32.xlu0 %v326, 126
        %v332 = vpop.permute.xlu0 %331
        %vm333 = vcmask 1031168
        %v334 = vsel %vm333, %v330, %v332
        %336 = vst [vmem:[#allocation2 + $0x20] sm:$0xff] %v334
        %s337 = scalar_lea.vmem %s262, 16 [#allocation3]
        %v338 = vld [vmem:[%s337] sm:$0xff]
        %339 = vst [vmem:[#allocation2 + $0x8] sm:$0xff] %v338
        %v340 = vld [vmem:[%s337] sm:$0xff]
        %v341 = vld [vmem:[%s337 + $0x8] sm:$0xff]
        %344 = vrot.lane.b32.xlu0 %v340, 127
        %v345 = vpop.permute.xlu0 %344
        %346 = vrot.lane.b32.xlu0 %v341, 127
        %v347 = vpop.permute.xlu0 %346
        %v348 = vsel %vm321, %v345, %v347
        %350 = vst [vmem:[#allocation2 + $0x18] sm:$0xff] %v348
        %v351 = vld [vmem:[%s337] sm:$0xff]
        %v352 = vld [vmem:[%s337 + $0x8] sm:$0xff]
        %355 = vrot.lane.b32.xlu0 %v351, 126
        %v356 = vpop.permute.xlu0 %355
        %357 = vrot.lane.b32.xlu0 %v352, 126
        %v358 = vpop.permute.xlu0 %357
        %v359 = vsel %vm333, %v356, %v358
        %361 = vst [vmem:[#allocation2 + $0x28] sm:$0xff] %v359
        %v362 = vld [vmem:[%s3] sm:$0xff]
        %v363 = vld [vmem:[#allocation2] sm:$0xff]
        %v364 = vld [vmem:[#allocation2 + $0x8] sm:$0xff]
        %v365 = vld [vmem:[#allocation2 + $0x10] sm:$0xff]
        %v366 = vld [vmem:[#allocation2 + $0x18] sm:$0xff]
        %v367 = vld [vmem:[#allocation2 + $0x20] sm:$0xff]
        %v368 = vld [vmem:[#allocation2 + $0x28] sm:$0xff]
        %vm369 = vcmask 195584
        %v371 = vsel %vm369, %v362, 0
        %373 = vmatprep.subr.mxu0 %v364
        %374 = vmatpush1.msra.mxu0 %v363
        %375 = vmatprep.subr.mxu0 %v366
        %376 = vmatpush1.msra.mxu0 %v365
        %377 = vmatprep.subr.mxu0 %v368
        %378 = vmatpush1.msra.mxu0 %v367
        %379 = vmatprep.subr.mxu0 0.0
        %380 = vmatpush1.msra.mxu0 0.0
        %381 = vmatprep.subr.mxu0 0.0
        %382 = vmatpush1.msra.mxu0 0.0
        %383 = vmatprep.subr.mxu0 0.0
        %384 = vmatpush1.msra.mxu0 0.0
        %385 = vmatprep.subr.mxu0 0.0
        %386 = vmatpush1.msra.mxu0 0.0
        %387 = vmatprep.subr.mxu0 0.0
        %388 = vmatpush1.msra.mxu0 0.0
        %389 = vmatprep.subr.mxu0 0.0
        %390 = vmatpush1.msra.mxu0 0.0
        %391 = vmatprep.subr.mxu0 0.0
        %392 = vmatpush1.msra.mxu0 0.0
        %393 = vmatprep.subr.mxu0 0.0
        %394 = vmatpush1.msra.mxu0 0.0
        %395 = vmatprep.subr.mxu0 0.0
        %396 = vmatpush1.msra.mxu0 0.0
        %397 = vmatprep.subr.mxu0 0.0
        %398 = vmatpush1.msra.mxu0 0.0
        %399 = vmatprep.subr.mxu0 0.0
        %400 = vmatpush1.msra.mxu0 0.0
        %401 = vmatprep.subr.mxu0 0.0
        %402 = vmatpush1.msra.mxu0 0.0
        %403 = vmatprep.subr.mxu0 0.0
        %404 = vmatpush1.msra.mxu0 0.0
        %405 = vmatprep.subr.mxu0 0.0
        %406 = vmatpush1.msra.mxu0 0.0
        %407 = vmatprep.subr.mxu0 0.0
        %408 = vmatpush1.msra.mxu0 0.0
        %409 = vmatprep.subr.mxu0 0.0
        %410 = vmatpush1.msra.mxu0 0.0
        %411 = vmatprep.subr.mxu0 0.0
        %412 = vmatpush1.msra.mxu0 0.0
        %413 = vmatprep.subr.mxu0 0.0
        %414 = vmatpush1.msra.mxu0 0.0
        %415 = vmatprep.subr.mxu0 0.0
        %416 = vmatpush1.msra.mxu0 0.0
        %417 = vmatprep.subr.mxu0 0.0
        %418 = vmatpush1.msra.mxu0 0.0
        %419 = vmatprep.subr.mxu0 0.0
        %420 = vmatpush1.msra.mxu0 0.0
        %421 = vmatprep.subr.mxu0 0.0
        %422 = vmatpush1.msra.mxu0 0.0
        %423 = vmatprep.subr.mxu0 0.0
        %424 = vmatpush1.msra.mxu0 0.0
        %425 = vmatprep.subr.mxu0 0.0
        %426 = vmatpush1.msra.mxu0 0.0
        %427 = vmatprep.subr.mxu0 0.0
        %428 = vmatpush1.msra.mxu0 0.0
        %429 = vmatprep.subr.mxu0 0.0
        %430 = vmatpush1.msra.mxu0 0.0
        %431 = vmatprep.subr.mxu0 0.0
        %432 = vmatpush1.msra.mxu0 0.0
        %433 = vmatprep.subr.mxu0 0.0
        %434 = vmatpush1.msra.mxu0 0.0
        %435 = vmatprep.subr.mxu0 0.0
        %436 = vmatpush1.msra.mxu0 0.0
        %437 = vmatprep.mubr.f32.mxu0 0.0
        %438 = vmatmul.mubr.f32.gmra.mrb[0].mxu0 %v371
        %v439 = vpop.f32.mrb[0].mxu0
        %v440 = vadd.f32 0.0, %v439
        %v441 = vpop.f32.mrb[0].mxu0
        %v442 = vadd.f32 0.0, %v441
        %443 = vdwg.mxu0
        %v444 = vld [vmem:[%s4] sm:$0xff]
        %v445 = vld [vmem:[%s5] sm:$0xff]
        %v446 = vld [vmem:[%s303] sm:$0x1]
        %v447 = vld [vmem:[%s308] sm:$0x1]
        %v449 = vlaneseq
        %v450 = vshrl.u32 %v449, 7
        %v451 = vsub.s32 0, %v450
        %v452 = vrot.slane %v446, %v451
        %v454 = vmul.f32 %v440, %v452
        %455 = vadd.xlane.f32.xlu0 %v454
        %v456 = vpop.xlane.xlu0 %455
        %v457 = vrot.slane %v456, 4
        %v458 = vadd.f32 %v456, %v457
        %v459 = vrot.slane %v458, 2
        %v460 = vadd.f32 %v458, %v459
        %v461 = vrot.slane %v460, 1
        %v462 = vadd.f32 %v460, %v461
        %s463 = vtos %v462
        %v464 = vstv %s463
        %v465 = vmul.f32 %v464, %v447
        %v466 = vmul.f32 %v454, %v454
        %467 = vadd.xlane.f32.xlu0 %v466
        %v468 = vpop.xlane.xlu0 %467
        %v469 = vrot.slane %v468, 4
        %v470 = vadd.f32 %v468, %v469
        %v471 = vrot.slane %v470, 2
        %v472 = vadd.f32 %v470, %v471
        %v473 = vrot.slane %v472, 1
        %v474 = vadd.f32 %v472, %v473
        %s475 = vtos %v474
        %v476 = vstv %s475
        %v477 = vmul.f32 %v476, %v447
        %v478 = vmul.f32 %v465, %v465
        %v479 = vsub.f32 %v477, %v478
        %v480 = vmax.f32 %v479, 0.0
        %v482 = vlaneseq
        %v483 = vshrl.u32 %v482, 7
        %v484 = vsub.s32 0, %v483
        %v485 = vrot.slane %v465, %v484
        %486 = vset.pattern.permute.xlu0 0
        %487 = vperm.xlu0 %486, %v485
        %v488 = vpop.permute.xlu0 %487
        %v490 = vsub.f32 %v454, %v488
        %v491 = vadd.f32 %v480, 1e-06
        %v492 = vrsqrt.pop %v491
        %v494 = vlaneseq
        %v495 = vshrl.u32 %v494, 7
        %v496 = vsub.s32 0, %v495
        %v497 = vrot.slane %v492, %v496
        %498 = vset.pattern.permute.xlu0 0
        %499 = vperm.xlu0 %498, %v497
        %v500 = vpop.permute.xlu0 %499
        %v502 = vmul.f32 %v490, %v500
        %504 = vset.pattern.permute.xlu0 0
        %505 = vperm.xlu0 %504, %v444
        %v506 = vpop.permute.xlu0 %505
        %v508 = vmul.f32 %v502, %v506
        %510 = vset.pattern.permute.xlu0 0
        %511 = vperm.xlu0 %510, %v445
        %v512 = vpop.permute.xlu0 %511
        %v514 = vadd.f32 %v508, %v512
        %v515 = vmax.f32 %v514, 0.0
        %v516 = vmul.f32 %v515, %v452
        %517 = vst [vmem:[%s298] sm:$0xff] %v516
        %s518 = scalar_lea.vmem %s303, 1
        %v519 = vld [vmem:[%s518] sm:$0x1]
        %s520 = scalar_lea.vmem %s308, 1
        %v521 = vld [vmem:[%s520] sm:$0x1]
        %v523 = vlaneseq
        %v524 = vshrl.u32 %v523, 7
        %v525 = vsub.s32 0, %v524
        %v526 = vrot.slane %v519, %v525
        %v528 = vmul.f32 %v442, %v526
        %529 = vadd.xlane.f32.xlu0 %v528
        %v530 = vpop.xlane.xlu0 %529
        %v531 = vrot.slane %v530, 4
        %v532 = vadd.f32 %v530, %v531
        %v533 = vrot.slane %v532, 2
        %v534 = vadd.f32 %v532, %v533
        %v535 = vrot.slane %v534, 1
        %v536 = vadd.f32 %v534, %v535
        %s537 = vtos %v536
        %v538 = vstv %s537
        %v539 = vmul.f32 %v538, %v521
        %v540 = vmul.f32 %v528, %v528
        %541 = vadd.xlane.f32.xlu0 %v540
        %v542 = vpop.xlane.xlu0 %541
        %v543 = vrot.slane %v542, 4
        %v544 = vadd.f32 %v542, %v543
        %v545 = vrot.slane %v544, 2
        %v546 = vadd.f32 %v544, %v545
        %v547 = vrot.slane %v546, 1
        %v548 = vadd.f32 %v546, %v547
        %s549 = vtos %v548
        %v550 = vstv %s549
        %v551 = vmul.f32 %v550, %v521
        %v552 = vmul.f32 %v539, %v539
        %v553 = vsub.f32 %v551, %v552
        %v554 = vmax.f32 %v553, 0.0
        %v556 = vlaneseq
        %v557 = vshrl.u32 %v556, 7
        %v558 = vsub.s32 0, %v557
        %v559 = vrot.slane %v539, %v558
        %560 = vset.pattern.permute.xlu0 0
        %561 = vperm.xlu0 %560, %v559
        %v562 = vpop.permute.xlu0 %561
        %v564 = vsub.f32 %v528, %v562
        %v565 = vadd.f32 %v554, 1e-06
        %v566 = vrsqrt.pop %v565
        %v568 = vlaneseq
        %v569 = vshrl.u32 %v568, 7
        %v570 = vsub.s32 0, %v569
        %v571 = vrot.slane %v566, %v570
        %572 = vset.pattern.permute.xlu0 0
        %573 = vperm.xlu0 %572, %v571
        %v574 = vpop.permute.xlu0 %573
        %v576 = vmul.f32 %v564, %v574
        %v577 = vmul.f32 %v576, %v506
        %v578 = vadd.f32 %v577, %v512
        %v579 = vmax.f32 %v578, 0.0
        %v580 = vmul.f32 %v579, %v526
        %s581 = scalar_lea.vmem %s298, 8 [#allocation6]
        %582 = vst [vmem:[%s581] sm:$0xff] %v580
        %s583 = sand.u32 %s172, 1
        %s584 = scalar_lea.sflag [#allocation5], %s583
        %s585 = sand.u32 %s172, 1
        %s586 = smul.addr %s585, 16
        %s587 = scalar_lea.vmem [#allocation6], %s586
        // Predicated region
        $region49: #{tpu_custom_call.1} parent=43 // pred_check
          %p588 = pneg %p182
        $region50: #{tpu_custom_call.1} parent=43 // pred_check_branch
          %590 = sbr.rel (%p588) target = $region52
        $region51: #{tpu_custom_call.1} parent=43 // pred_region
          %s591 = smul.u32 2, %s23
          %s593 = ssub.s32 256, 256
          %594 = vsyncadd %s584, %s593
          %s595 = smul.addr %s591, 128
          %s596 = scalar_lea.hbm %s6, %s595
          %s597 = sshll.u32 %s587, 4
          %s598 = int_to_ptr.vmem [resolvable:$true] %s597
          %603 = dma.vmem_to_hbm [thread:$0]  %s598, 256, %s596, %s584, 128, 128, 8
        $region52: #{tpu_custom_call.1} parent=43 // pred_fallthru
          _
      $region44: #{tpu_custom_call.1} parent=5 // pred_fallthru
        _
      %p604 = scmp.le.s32.totalorder 2, %s18
      // Predicated region
      $region53: #{tpu_custom_call.1} parent=5 // pred_check
        %p605 = pneg %p604
      $region54: #{tpu_custom_call.1} parent=5 // pred_check_branch
        %607 = sbr.rel (%p605) target = $region56
      $region55: #{tpu_custom_call.1} parent=5 // pred_region
        %s608 = ssub.s32 %s18, 2
        // Predicated region
        $region57: #{tpu_custom_call.1} parent=55 // pred_check
          %p609 = pneg %p188
        $region58: #{tpu_custom_call.1} parent=55 // pred_check_branch
          %611 = sbr.rel (%p609) target = $region60
        $region59: #{tpu_custom_call.1} parent=55 // pred_region
          %s612 = sand.u32 %s173, 1
          %s613 = scalar_lea.sflag [#allocation5], %s612
          %s614 = sand.u32 %s173, 1
          %s615 = smul.addr %s614, 16
          %s616 = scalar_lea.vmem [#allocation6], %s615
          %617 = dma.done %s613, 256
        $region60: #{tpu_custom_call.1} parent=55 // pred_fallthru
          _
      $region56: #{tpu_custom_call.1} parent=5 // pred_fallthru
        _
    $region6: #{tpu_custom_call.1} parent=1 // loop_footer
      %s22 = sadd.s32 1, %s18
    $region7: #{tpu_custom_call.1} parent=1 // loop_footer_branch
      %17 = sbr.rel target = $region3
    $region8: #{tpu_custom_call.1} parent=1 // loop_exit
      _
    %618 = vsyncpa [#allocation4], 1
    %s619 = scalar_lea.sflag [#allocation4], 1
    %620 = vsyncpa %s619, 1
    %621 = vsyncpa [#allocation5], 1
    %s622 = scalar_lea.sflag [#allocation5], 1
    %623 = vsyncpa %s622, 1

</llo_original>
